<compile_context>
chip_gen: v7x
topology: tpu7x:2x2x1
jax: 0.10.0
libtpu: 0.0.40
codegen_flags: <defaults>
</compile_context>

<pallas_src>
import jax
import jax.numpy as jnp
from jax.experimental import pallas as pl
from jax.experimental.pallas import tpu as pltpu


def _round_up(x, m):
    return (x + m - 1) // m * m


# ----------------------------------------------------------------------------
# Pallas kernel: feature-major multi-hot embedding + folded-affine MLP
# ----------------------------------------------------------------------------
def _make_mlp_kernel(n_mid_layers, ncat_pad):
    """refs = [cat (C,T) i32, cont (ncp,T) f32, W1t (H1,K), b1 (H1,1),
               (Wi (h,n_in), bi (h,1)) * n_mid, Wo (out,Hl), bo (out,1),
               o (out,T)]"""

    def kernel(*refs):
        cat_ref, cont_ref, w1_ref, b1_ref = refs[:4]
        o_ref = refs[-1]
        cdt = w1_ref.dtype                      # matmul compute dtype (bf16/f32)
        tile_b = cat_ref.shape[-1]
        n_cat_cols = cat_ref.shape[0]

        # Multi-hot, transposed: rows = concatenated id space (padded to 48),
        # cols = batch.  Bool OR accumulation + one cast (review item).
        iota = jax.lax.broadcasted_iota(jnp.int32, (ncat_pad, tile_b), 0)
        hot = iota == cat_ref[0:1, :]
        for j in range(1, n_cat_cols):          # categorical column count: tiny, static
            hot = hot | (iota == cat_ref[j:j + 1, :])
        feat_cat = jnp.where(hot, 1.0, 0.0).astype(cdt)

        # Fused layer-1 operand: [one-hot ; bn-folded continuous] along
        # sublanes (48 is sublane-tile aligned for f32 and bf16).
        feat = jnp.concatenate([feat_cat, cont_ref[...].astype(cdt)], axis=0)

        # Layer 1: embeddings + continuous + bn_cont all folded into W1t/b1.
        h = jnp.dot(w1_ref[...], feat, preferred_element_type=jnp.float32)
        h = jnp.maximum(h + b1_ref[...], 0.0)

        pos = 4
        for _ in range(n_mid_layers):           # Linear -> ReLU (next-BN folded)
            w_ref, b_ref = refs[pos], refs[pos + 1]
            pos += 2
            h = jnp.dot(w_ref[...], h.astype(cdt),
                        preferred_element_type=jnp.float32)
            h = jnp.maximum(h + b_ref[...], 0.0)

        # Output layer: (out, Hl) @ (Hl, T) -> lane-dense (out, T) slab.
        wo_ref, bo_ref = refs[pos], refs[pos + 1]
        out = jnp.dot(wo_ref[...], h.astype(cdt),
                      preferred_element_type=jnp.float32) + bo_ref[...]
        o_ref[...] = out.astype(o_ref.dtype)

    return kernel


def _choose_tile(n_chunks, max_chunks):
    """Pick (#128-lane chunks per tile, #grid steps).  >=2 steps whenever the
    batch has >=2 chunks so 'parallel' can shard across both v7x TensorCores;
    cdiv-based so a batch just over a tile boundary is not padded to a whole
    extra tile."""
    min_steps = 2 if n_chunks >= 2 else 1
    steps = max(min_steps, pl.cdiv(n_chunks, max_chunks))
    tile_chunks = pl.cdiv(n_chunks, steps)
    return tile_chunks, steps


def tabular_mlp_pallas(folded, x_cat, x_cont, *, max_tile_b=2048):
    """x_cat: (B, C) int ids, x_cont: (B, n_cont) f32  ->  (B, out_size) f32.

    max_tile_b=2048 keeps each tile well under v5e's default scoped VMEM; it
    can be raised (4096-8192) on v6e/v7x together with vmem_limit_bytes to
    amortize per-grid-step overhead for very large batches."""
    B, n_cat_cols = x_cat.shape
    n_cont = x_cont.shape[1]
    ncat_pad = folded["ncat_pad"]
    n_cont_pad = folded["n_cont_pad"]
    out_size = folded["b_out_t"].shape[0]

    n_chunks = pl.cdiv(max(B, 1), 128)
    tile_chunks, steps = _choose_tile(n_chunks, max(1, max_tile_b // 128))
    tile_b = tile_chunks * 128
    b_pad = tile_b * steps

    # Feature-major operands: batch in lanes -> dense VMEM tiles for the narrow
    # cat/cont streams and a lane-dense output.  Offset each categorical column
    # into the concatenated id space.  Padded batch columns get id 0 (their
    # outputs are discarded below).
    cat = x_cat.astype(jnp.int32) + folded["cat_offsets"]
    cat_t = jnp.pad(cat, ((0, b_pad - B), (0, 0))).T                 # (C, b_pad)
    cont_t = jnp.pad(x_cont.astype(jnp.float32),
                     ((0, b_pad - B), (0, n_cont_pad - n_cont))).T   # (ncp, b_pad)

    operands = [cat_t, cont_t, folded["w1_t"], folded["b1_t"]]
    for w, b in folded["mid"]:
        operands += [w, b]
    operands += [folded["w_out_t"], folded["b_out_t"]]

    def batch_spec(rows):
        return pl.BlockSpec((rows, tile_b), lambda i: (0, i))

    def resident_spec(arr):
        # Constant index map -> weight/bias stays resident across the grid.
        return pl.BlockSpec(arr.shape, lambda i: (0, 0))

    in_specs = [batch_spec(n_cat_cols), batch_spec(n_cont_pad)] + [
        resident_spec(a) for a in operands[2:]
    ]

    kernel = _make_mlp_kernel(len(folded["mid"]), ncat_pad)

    out_t = pl.pallas_call(
        kernel,
        out_shape=jax.ShapeDtypeStruct((out_size, b_pad), jnp.float32),
        grid=(steps,),
        in_specs=in_specs,
        out_specs=pl.BlockSpec((out_size, tile_b), lambda i: (0, i)),
        compiler_params=pltpu.CompilerParams(
            dimension_semantics=("parallel",)),
    )(*operands)
    return out_t[:, :B].T                                            # (B, out)


# ----------------------------------------------------------------------------
# Parameter construction (deterministic synthetic) + offline folding
# ----------------------------------------------------------------------------
def init_params(key, emb_size, n_cont, layers, out_size, eps=1e-5):
    keys = iter(jax.random.split(key, 64))
    params = {}

    # Embedding tables: nn.Embedding default init ~ N(0, 1)
    params["emb_tables"] = [
        jax.random.normal(next(keys), (ni, nf), jnp.float32) for ni, nf in emb_size
    ]
    n_emb = sum(nf for _, nf in emb_size)

    # bn_cont (eval mode) as a per-feature affine over the full feature vector.
    bn_w = 1.0 + 0.1 * jax.random.normal(next(keys), (n_cont,), jnp.float32)
    bn_b = 0.1 * jax.random.normal(next(keys), (n_cont,), jnp.float32)
    bn_mean = 0.1 * jax.random.normal(next(keys), (n_cont,), jnp.float32)
    bn_var = jnp.abs(jax.random.normal(next(keys), (n_cont,), jnp.float32)) + 0.5
    cont_scale = bn_w / jnp.sqrt(bn_var + eps)
    cont_shift = bn_b - bn_mean * cont_scale
    n_feat = n_emb + n_cont
    in_scale = jnp.concatenate([jnp.ones((n_emb,), jnp.float32), cont_scale])
    in_shift = jnp.concatenate([jnp.zeros((n_emb,), jnp.float32), cont_shift])
    params["in_scale"] = in_scale.reshape(1, n_feat)
    params["in_shift"] = in_shift.reshape(1, n_feat)

    # Hidden blocks: Linear -> ReLU -> BatchNorm1d (eval) -> Dropout(identity)
    hidden = []
    n_in = n_feat
    for h in layers:
        bound = 1.0 / jnp.sqrt(jnp.float32(n_in))
        w = jax.random.uniform(next(keys), (n_in, h), jnp.float32, -bound, bound)
        b = jax.random.uniform(next(keys), (1, h), jnp.float32, -bound, bound)
        g_w = 1.0 + 0.1 * jax.random.normal(next(keys), (h,), jnp.float32)
        g_b = 0.1 * jax.random.normal(next(keys), (h,), jnp.float32)
        g_mean = 0.1 * jax.random.normal(next(keys), (h,), jnp.float32)
        g_var = jnp.abs(jax.random.normal(next(keys), (h,), jnp.float32)) + 0.5
        scale = (g_w / jnp.sqrt(g_var + eps)).reshape(1, h)
        shift = (g_b - g_mean * (g_w / jnp.sqrt(g_var + eps))).reshape(1, h)
        hidden.append((w, b, scale, shift))
        n_in = h
    params["hidden"] = hidden

    bound = 1.0 / jnp.sqrt(jnp.float32(n_in))
    params["out_w"] = jax.random.uniform(
        next(keys), (n_in, out_size), jnp.float32, -bound, bound
    )
    params["out_b"] = jax.random.uniform(
        next(keys), (1, out_size), jnp.float32, -bound, bound
    )
    return params


def fold_params(params, emb_size, n_cont, compute_dtype=jnp.bfloat16):
    """Exact (eval-mode) algebraic refactor of the TabularModel parameters,
    laid out feature-major (transposed) for the kernel."""
    n_emb = sum(nf for _, nf in emb_size)
    hidden = params["hidden"]
    w1, b1, _, _ = hidden[0]                         # (n_feat, H1), (1, H1)

    # Embedding tables pre-multiplied by the matching rows of the first Linear,
    # stacked over the concatenated id axis, zero-padded to a tile-aligned K.
    t_blocks, offsets = [], []
    row_off, id_off = 0, 0
    for tbl, (ni, nf) in zip(params["emb_tables"], emb_size):
        t_blocks.append(tbl @ w1[row_off:row_off + nf])   # (ni, H1)
        offsets.append(id_off)
        row_off += nf
        id_off += ni
    ncat_total = id_off
    ncat_pad = _round_up(ncat_total, 16)             # bf16/f32 sublane aligned
    t_emb = jnp.concatenate(t_blocks, axis=0)
    t_emb = jnp.pad(t_emb, ((0, ncat_pad - ncat_total), (0, 0)))

    # Fold bn_cont into the continuous rows of the first Linear.
    cont_scale = params["in_scale"][0, n_emb:]       # (n_cont,)
    cont_shift = params["in_shift"][0, n_emb:]
    w1_cont = w1[n_emb:]                             # (n_cont, H1)
    n_cont_pad = _round_up(n_cont, 8)
    w1c = jnp.pad(cont_scale[:, None] * w1_cont,
                  ((0, n_cont_pad - n_cont), (0, 0)))
    b1f = b1 + cont_shift[None, :] @ w1_cont         # (1, H1)

    # Single fused layer-1 weight [T_emb ; W1_cont], transposed to (H1, K).
    w1_all_t = jnp.concatenate([t_emb, w1c], axis=0).T.astype(compute_dtype)

    # Fold each post-ReLU BN into the *next* Linear; store transposed.
    mid = []
    prev_scale, prev_shift = hidden[0][2], hidden[0][3]        # (1, H1)
    for (w, b, g, be) in hidden[1:]:
        mid.append(((prev_scale[0][:, None] * w).T.astype(compute_dtype),
                    (b + prev_shift @ w).T.astype(jnp.float32)))
        prev_scale, prev_shift = g, be

    w_out, b_out = params["out_w"], params["out_b"]
    w_out_t = (prev_scale[0][:, None] * w_out).T.astype(compute_dtype)
    b_out_t = (b_out + prev_shift @ w_out).T.astype(jnp.float32)

    return {
        "cat_offsets": jnp.array(offsets, jnp.int32).reshape(1, -1),
        "ncat_pad": ncat_pad,
        "n_cont_pad": n_cont_pad,
        "w1_t": w1_all_t,                            # (H1, ncat_pad + n_cont_pad)
        "b1_t": b1f.T.astype(jnp.float32),           # (H1, 1)
        "mid": mid,                                  # [((h, n_in), (h, 1)), ...]
        "w_out_t": w_out_t,                          # (out, H_last)
        "b_out_t": b_out_t,                          # (out, 1)
    }


def tabular_forward_ref(params, x_cat, x_cont):
    # Pure-JAX reference with the ORIGINAL (unfolded) eval-mode semantics.
    embs = [tbl[x_cat[:, i]] for i, tbl in enumerate(params["emb_tables"])]
    x = jnp.concatenate(embs + [x_cont], axis=1)
    x = x * params["in_scale"] + params["in_shift"]
    for (w, b, g, be) in params["hidden"]:
        x = jnp.maximum(x @ w + b, 0.0) * g + be
    return x @ params["out_w"] + params["out_b"]


if __name__ == "__main__":
    # Categorical cardinalities from the taxi notebook:
    # Hour=24, AMPM=2, Weekday=7, DoW=7 -> emb dims min(50,(n+1)//2)
    cats_size = [24, 2, 7, 7]
    emb_size = [(s, min(50, (s + 1) // 2)) for s in cats_size]
    n_cont = 6
    layers = [64, 32]
    out_size = 1
    B = 16

    key = jax.random.PRNGKey(0)
    k_par, k_cat, k_cont = jax.random.split(key, 3)

    params = init_params(k_par, emb_size, n_cont, layers, out_size)

    maxes = jnp.array(cats_size, jnp.int32)
    x_cat = (
        jax.random.randint(k_cat, (B, len(cats_size)), 0, 2**16, jnp.int32) % maxes
    ).astype(jnp.int32)
    x_cont = jax.random.normal(k_cont, (B, n_cont), jnp.float32)
    ref = jax.block_until_ready(tabular_forward_ref(params, x_cat, x_cont))

    # 1) float32 kernel path: validates the folding algebra exactly.
    folded_f32 = fold_params(params, emb_size, n_cont, compute_dtype=jnp.float32)
    out_f32 = jax.block_until_ready(tabular_mlp_pallas(folded_f32, x_cat, x_cont))
    assert out_f32.shape == (B, out_size)
    assert jnp.allclose(out_f32, ref, atol=1e-4, rtol=1e-4), (out_f32, ref)

    # 2) bf16 matmul operands with f32 accumulation (production path).
    folded_bf16 = fold_params(params, emb_size, n_cont, compute_dtype=jnp.bfloat16)
    out_bf16 = jax.block_until_ready(tabular_mlp_pallas(folded_bf16, x_cat, x_cont))
    assert out_bf16.shape == (B, out_size)
    assert jnp.allclose(out_bf16, ref, atol=5e-2, rtol=5e-2), (out_bf16, ref)

    # 3) batch that is not a lane multiple -> padding path + >1 grid step.
    B2 = 300
    k_cat2, k_cont2 = jax.random.split(jax.random.PRNGKey(1))
    x_cat2 = (
        jax.random.randint(k_cat2, (B2, len(cats_size)), 0, 2**16, jnp.int32) % maxes
    ).astype(jnp.int32)
    x_cont2 = jax.random.normal(k_cont2, (B2, n_cont), jnp.float32)
    out2 = jax.block_until_ready(tabular_mlp_pallas(folded_bf16, x_cat2, x_cont2))
    ref2 = jax.block_until_ready(tabular_forward_ref(params, x_cat2, x_cont2))
    assert out2.shape == (B2, out_size)
    assert jnp.allclose(out2, ref2, atol=5e-2, rtol=5e-2), (out2, ref2)

    print("KERNEL_OK")
</pallas_src>

<mosaic_0001>
module attributes {stable_mosaic.version = 11 : i64} {
  func.func @kernel(%arg0: i32, %arg1: memref<4x128xi32, #tpu.memory_space<vmem>>, %arg2: memref<8x128xf32, #tpu.memory_space<vmem>>, %arg3: memref<64x56xf32, #tpu.memory_space<vmem>>, %arg4: memref<64x1xf32, #tpu.memory_space<vmem>>, %arg5: memref<32x64xf32, #tpu.memory_space<vmem>>, %arg6: memref<32x1xf32, #tpu.memory_space<vmem>>, %arg7: memref<1x32xf32, #tpu.memory_space<vmem>>, %arg8: memref<1x1xf32, #tpu.memory_space<vmem>>, %arg9: memref<1x128xf32, #tpu.memory_space<vmem>>) attributes {dimension_semantics = [#tpu.dimension_semantics<parallel>], iteration_bounds = array<i64: 1>, scalar_prefetch = 0 : i64, scratch_operands = 0 : i64, tpu.core_type = #tpu.core_type<tc>, window_params = [{transform_indices = @transform_0, window_bounds = array<i64: 4, 128>}, {transform_indices = @transform_1, window_bounds = array<i64: 8, 128>}, {pipeline_mode = #tpu.pipeline_mode<synchronous>, transform_indices = @transform_2, window_bounds = array<i64: 64, 56>}, {pipeline_mode = #tpu.pipeline_mode<synchronous>, transform_indices = @transform_3, window_bounds = array<i64: 64, 1>}, {pipeline_mode = #tpu.pipeline_mode<synchronous>, transform_indices = @transform_4, window_bounds = array<i64: 32, 64>}, {pipeline_mode = #tpu.pipeline_mode<synchronous>, transform_indices = @transform_5, window_bounds = array<i64: 32, 1>}, {pipeline_mode = #tpu.pipeline_mode<synchronous>, transform_indices = @transform_6, window_bounds = array<i64: 1, 32>}, {pipeline_mode = #tpu.pipeline_mode<synchronous>, transform_indices = @transform_7, window_bounds = array<i64: 1, 1>}, {transform_indices = @transform_8, window_bounds = array<i64: 1, 128>}]} {
    %0 = tpu.iota {dimensions = array<i32: 0>} : vector<48x128xi32>
    %c0 = arith.constant 0 : index
    %c0_0 = arith.constant 0 : index
    %1 = vector.load %arg1[%c0, %c0_0] : memref<4x128xi32, #tpu.memory_space<vmem>>, vector<1x128xi32>
    %2 = vector.broadcast %1 : vector<1x128xi32> to vector<48x128xi32>
    %3 = arith.cmpi eq, %0, %2 : vector<48x128xi32>
    %c1 = arith.constant 1 : index
    %c0_1 = arith.constant 0 : index
    %4 = vector.load %arg1[%c1, %c0_1] : memref<4x128xi32, #tpu.memory_space<vmem>>, vector<1x128xi32>
    %5 = vector.broadcast %4 : vector<1x128xi32> to vector<48x128xi32>
    %6 = arith.cmpi eq, %0, %5 : vector<48x128xi32>
    %7 = arith.ori %3, %6 : vector<48x128xi1>
    %c2 = arith.constant 2 : index
    %c0_2 = arith.constant 0 : index
    %8 = vector.load %arg1[%c2, %c0_2] : memref<4x128xi32, #tpu.memory_space<vmem>>, vector<1x128xi32>
    %9 = vector.broadcast %8 : vector<1x128xi32> to vector<48x128xi32>
    %10 = arith.cmpi eq, %0, %9 : vector<48x128xi32>
    %11 = arith.ori %7, %10 : vector<48x128xi1>
    %c3 = arith.constant 3 : index
    %c0_3 = arith.constant 0 : index
    %12 = vector.load %arg1[%c3, %c0_3] : memref<4x128xi32, #tpu.memory_space<vmem>>, vector<1x128xi32>
    %13 = vector.broadcast %12 : vector<1x128xi32> to vector<48x128xi32>
    %14 = arith.cmpi eq, %0, %13 : vector<48x128xi32>
    %15 = arith.ori %11, %14 : vector<48x128xi1>
    %cst = arith.constant 1.000000e+00 : f32
    %cst_4 = arith.constant 0.000000e+00 : f32
    %16 = vector.broadcast %cst : f32 to vector<48x128xf32>
    %17 = vector.broadcast %cst_4 : f32 to vector<48x128xf32>
    %18 = arith.select %15, %16, %17 : vector<48x128xi1>, vector<48x128xf32>
    %c0_5 = arith.constant 0 : index
    %c0_6 = arith.constant 0 : index
    %19 = vector.load %arg2[%c0_5, %c0_6] : memref<8x128xf32, #tpu.memory_space<vmem>>, vector<8x128xf32>
    %20 = tpu.concatenate %18, %19 in 0 : vector<48x128xf32>, vector<8x128xf32> -> vector<56x128xf32>
    %c0_7 = arith.constant 0 : index
    %c0_8 = arith.constant 0 : index
    %21 = vector.load %arg3[%c0_7, %c0_8] : memref<64x56xf32, #tpu.memory_space<vmem>>, vector<64x56xf32>
    %cst_9 = arith.constant dense<0.000000e+00> : vector<64x128xf32>
    %22 = tpu.matmul %21, %20, %cst_9 {dimension_numbers = #tpu.dot_dimension_numbers<[1], [0], [0], [1], [0, 0, 1, 1], [], []>} : vector<64x56xf32>, vector<56x128xf32>, vector<64x128xf32> -> vector<64x128xf32>
    %c0_10 = arith.constant 0 : index
    %c0_11 = arith.constant 0 : index
    %23 = vector.load %arg4[%c0_10, %c0_11] : memref<64x1xf32, #tpu.memory_space<vmem>>, vector<64x1xf32>
    %24 = vector.broadcast %23 : vector<64x1xf32> to vector<64x128xf32>
    %25 = arith.addf %22, %24 : vector<64x128xf32>
    %cst_12 = arith.constant 0.000000e+00 : f32
    %26 = vector.broadcast %cst_12 : f32 to vector<64x128xf32>
    %27 = arith.maximumf %25, %26 : vector<64x128xf32>
    %c0_13 = arith.constant 0 : index
    %c0_14 = arith.constant 0 : index
    %28 = vector.load %arg5[%c0_13, %c0_14] : memref<32x64xf32, #tpu.memory_space<vmem>>, vector<32x64xf32>
    %cst_15 = arith.constant dense<0.000000e+00> : vector<32x128xf32>
    %29 = tpu.matmul %28, %27, %cst_15 {dimension_numbers = #tpu.dot_dimension_numbers<[1], [0], [0], [1], [0, 0, 1, 1], [], []>} : vector<32x64xf32>, vector<64x128xf32>, vector<32x128xf32> -> vector<32x128xf32>
    %c0_16 = arith.constant 0 : index
    %c0_17 = arith.constant 0 : index
    %30 = vector.load %arg6[%c0_16, %c0_17] : memref<32x1xf32, #tpu.memory_space<vmem>>, vector<32x1xf32>
    %31 = vector.broadcast %30 : vector<32x1xf32> to vector<32x128xf32>
    %32 = arith.addf %29, %31 : vector<32x128xf32>
    %cst_18 = arith.constant 0.000000e+00 : f32
    %33 = vector.broadcast %cst_18 : f32 to vector<32x128xf32>
    %34 = arith.maximumf %32, %33 : vector<32x128xf32>
    %c0_19 = arith.constant 0 : index
    %c0_20 = arith.constant 0 : index
    %35 = vector.load %arg7[%c0_19, %c0_20] : memref<1x32xf32, #tpu.memory_space<vmem>>, vector<1x32xf32>
    %cst_21 = arith.constant dense<0.000000e+00> : vector<1x128xf32>
    %36 = tpu.matmul %35, %34, %cst_21 {dimension_numbers = #tpu.dot_dimension_numbers<[1], [0], [0], [1], [0, 0, 1, 1], [], []>} : vector<1x32xf32>, vector<32x128xf32>, vector<1x128xf32> -> vector<1x128xf32>
    %c0_22 = arith.constant 0 : index
    %c0_23 = arith.constant 0 : index
    %37 = vector.load %arg8[%c0_22, %c0_23] : memref<1x1xf32, #tpu.memory_space<vmem>>, vector<1x1xf32>
    %38 = vector.broadcast %37 : vector<1x1xf32> to vector<1x128xf32>
    %39 = arith.addf %36, %38 : vector<1x128xf32>
    %c0_24 = arith.constant 0 : index
    %c0_25 = arith.constant 0 : index
    %40 = vector.load %arg9[%c0_24, %c0_25] : memref<1x128xf32, #tpu.memory_space<vmem>>, vector<1x128xf32>
    tpu.vector_store %arg9[%c0_24, %c0_25], %39 {strides = array<i32>} : memref<1x128xf32, #tpu.memory_space<vmem>>, vector<1x128xf32>,
    return
  }
  func.func @transform_0(%arg0: i32) -> (i32, i32) {
    %c0_i32 = arith.constant 0 : i32
    %c0_i32_0 = arith.constant 0 : i32
    return %c0_i32, %arg0 : i32, i32
  }
  func.func @transform_1(%arg0: i32) -> (i32, i32) {
    %c0_i32 = arith.constant 0 : i32
    %c0_i32_0 = arith.constant 0 : i32
    return %c0_i32, %arg0 : i32, i32
  }
  func.func @transform_2(%arg0: i32) -> (i32, i32) {
    %c0_i32 = arith.constant 0 : i32
    %c0_i32_0 = arith.constant 0 : i32
    %c0_i32_1 = arith.constant 0 : i32
    return %c0_i32, %c0_i32_0 : i32, i32
  }
  func.func @transform_3(%arg0: i32) -> (i32, i32) {
    %c0_i32 = arith.constant 0 : i32
    %c0_i32_0 = arith.constant 0 : i32
    %c0_i32_1 = arith.constant 0 : i32
    return %c0_i32, %c0_i32_0 : i32, i32
  }
  func.func @transform_4(%arg0: i32) -> (i32, i32) {
    %c0_i32 = arith.constant 0 : i32
    %c0_i32_0 = arith.constant 0 : i32
    %c0_i32_1 = arith.constant 0 : i32
    return %c0_i32, %c0_i32_0 : i32, i32
  }
  func.func @transform_5(%arg0: i32) -> (i32, i32) {
    %c0_i32 = arith.constant 0 : i32
    %c0_i32_0 = arith.constant 0 : i32
    %c0_i32_1 = arith.constant 0 : i32
    return %c0_i32, %c0_i32_0 : i32, i32
  }
  func.func @transform_6(%arg0: i32) -> (i32, i32) {
    %c0_i32 = arith.constant 0 : i32
    %c0_i32_0 = arith.constant 0 : i32
    %c0_i32_1 = arith.constant 0 : i32
    return %c0_i32, %c0_i32_0 : i32, i32
  }
  func.func @transform_7(%arg0: i32) -> (i32, i32) {
    %c0_i32 = arith.constant 0 : i32
    %c0_i32_0 = arith.constant 0 : i32
    %c0_i32_1 = arith.constant 0 : i32
    return %c0_i32, %c0_i32_0 : i32, i32
  }
  func.func @transform_8(%arg0: i32) -> (i32, i32) {
    %c0_i32 = arith.constant 0 : i32
    %c0_i32_0 = arith.constant 0 : i32
    return %c0_i32, %arg0 : i32, i32
  }
}

</mosaic_0001>

<llo_original>
// kernel: tpu_custom_call.1
$region0: #{tpu_custom_call.1}
  #allocation0 [shape = 'u32[]', space=smem, size = 0x4, offset = 0x4, fixed_abs, tag = 'smem constant byte address 0x4 - core index']
  #allocation1 [shape = 'u32[144,128]{1,0:T(1,128)}', space=vmem, size = 0x12000, scoped, tag = 'internal scratch']
  #allocation2 [shape = 'f32[1,1]{1,0:T(1,128)S(1)}', space=vmem, size = 0x200, scoped, tag = 'scoped memory for tpu_custom_call.1']
  %s0 = inlined_call_operand.vmem [shape: s32[4,128], index: 0, kind: input, shape index: {}]
  %s1 = inlined_call_operand.vmem [shape: f32[8,128], index: 1, kind: input, shape index: {}]
  %s2 = inlined_call_operand.vmem [shape: f32[64,56], index: 2, kind: input, shape index: {}]
  %s3 = inlined_call_operand.vmem [shape: f32[64,1], index: 3, kind: input, shape index: {}]
  %s4 = inlined_call_operand.vmem [shape: f32[32,64], index: 4, kind: input, shape index: {}]
  %s5 = inlined_call_operand.vmem [shape: f32[32,1], index: 5, kind: input, shape index: {}]
  %s6 = inlined_call_operand.vmem [shape: f32[1,32], index: 6, kind: input, shape index: {}]
  %s7 = inlined_call_operand.<no memory space> [shape: f32[1,1], index: 7, kind: input, shape index: {}]
  %s8 = inlined_call_operand.hbm [shape: f32[1,128], index: 8, kind: output, shape index: {}]
  %s9 = sld [smem:[#allocation0]]
  $region42: #{tpu_custom_call.1} parent=0
    _
  %s11 = ssub.s32 1, %s9
  %s12 = scalar_select 0, %s11, %s9
  %v13 = vstv %s7
  %14 = vst [vmem:[#allocation2] sm:$0x1] %v13
  $region1: #{tpu_custom_call.1} parent=0
    #allocation3 [shape = 'u8[512]{0}', space=vmem, size = 0x400, scoped, tag = 'output window, operand 0, single buffered']
    #allocation4 [shape = 's32[1]{0}', space=sflag, size = 0x4, scoped, tag = 'scoped memory for tpu_custom_call.1']
    %15 = vsyncpa [#allocation4], 0
    // Predicated region
    $region2: #{tpu_custom_call.1} parent=1 // pred_check
      _
    $region3: #{tpu_custom_call.1} parent=1 // pred_check_branch
      %17 = sbr.rel (0) target = $region5
    $region4: #{tpu_custom_call.1} parent=1 // pred_region
      _
    $region5: #{tpu_custom_call.1} parent=1 // pred_fallthru
      _
    // Predicated region
    $region6: #{tpu_custom_call.1} parent=1 // pred_check
      _
    $region7: #{tpu_custom_call.1} parent=1 // pred_check_branch
      %19 = sbr.rel (0) target = $region9
    $region8: #{tpu_custom_call.1} parent=1 // pred_region
      _
    $region9: #{tpu_custom_call.1} parent=1 // pred_fallthru
      _
    // Predicated region
    $region10: #{tpu_custom_call.1} parent=1 // pred_check
      _
    $region11: #{tpu_custom_call.1} parent=1 // pred_check_branch
      %21 = sbr.rel (0) target = $region13
    $region12: #{tpu_custom_call.1} parent=1 // pred_region
      _
    $region13: #{tpu_custom_call.1} parent=1 // pred_fallthru
      _
    // Predicated region
    $region14: #{tpu_custom_call.1} parent=1 // pred_check
      _
    $region15: #{tpu_custom_call.1} parent=1 // pred_check_branch
      %23 = sbr.rel (0) target = $region17
    $region16: #{tpu_custom_call.1} parent=1 // pred_region
      _
    $region17: #{tpu_custom_call.1} parent=1 // pred_fallthru
      _
    // Predicated region
    $region18: #{tpu_custom_call.1} parent=1 // pred_check
      _
    $region19: #{tpu_custom_call.1} parent=1 // pred_check_branch
      %25 = sbr.rel (0) target = $region21
    $region20: #{tpu_custom_call.1} parent=1 // pred_region
      _
    $region21: #{tpu_custom_call.1} parent=1 // pred_fallthru
      _
    // Predicated region
    $region22: #{tpu_custom_call.1} parent=1 // pred_check
      _
    $region23: #{tpu_custom_call.1} parent=1 // pred_check_branch
      %27 = sbr.rel (0) target = $region25
    $region24: #{tpu_custom_call.1} parent=1 // pred_region
      _
    $region25: #{tpu_custom_call.1} parent=1 // pred_fallthru
      _
    // Predicated region
    $region26: #{tpu_custom_call.1} parent=1 // pred_check
      _
    $region27: #{tpu_custom_call.1} parent=1 // pred_check_branch
      %29 = sbr.rel (0) target = $region29
    $region28: #{tpu_custom_call.1} parent=1 // pred_region
      _
    $region29: #{tpu_custom_call.1} parent=1 // pred_fallthru
      _
    // Predicated region
    $region30: #{tpu_custom_call.1} parent=1 // pred_check
      _
    $region31: #{tpu_custom_call.1} parent=1 // pred_check_branch
      %31 = sbr.rel (0) target = $region33
    $region32: #{tpu_custom_call.1} parent=1 // pred_region
      _
    $region33: #{tpu_custom_call.1} parent=1 // pred_fallthru
      _
    %v32 = vlaneseq
    %v33 = vshrl.u32 %v32, 7
    %v34 = vadd.s32 %v33, 8
    %v35 = vadd.s32 %v33, 16
    %v36 = vadd.s32 %v33, 24
    %v37 = vadd.s32 %v33, 32
    %v38 = vadd.s32 %v33, 40
    %v39 = vld [vmem:[%s0] sm:$0x1]
    %v40 = vlaneseq
    %v41 = vshrl.u32 %v40, 7
    %v42 = vsub.s32 0, %v41
    %v43 = vrot.slane %v39, %v42
    %vm44 = vcmp.eq.s32.totalorder %v33, %v43
    %vm45 = vcmp.eq.s32.totalorder %v34, %v43
    %vm46 = vcmp.eq.s32.totalorder %v35, %v43
    %vm47 = vcmp.eq.s32.totalorder %v36, %v43
    %vm48 = vcmp.eq.s32.totalorder %v37, %v43
    %vm49 = vcmp.eq.s32.totalorder %v38, %v43
    %v50 = vld [vmem:[%s0 + $0x1] sm:$0x1]
    %v51 = vlaneseq
    %v52 = vshrl.u32 %v51, 7
    %v53 = vsub.s32 0, %v52
    %v54 = vrot.slane %v50, %v53
    %vm55 = vcmp.eq.s32.totalorder %v33, %v54
    %vm56 = vcmp.eq.s32.totalorder %v34, %v54
    %vm57 = vcmp.eq.s32.totalorder %v35, %v54
    %vm58 = vcmp.eq.s32.totalorder %v36, %v54
    %vm59 = vcmp.eq.s32.totalorder %v37, %v54
    %vm60 = vcmp.eq.s32.totalorder %v38, %v54
    %vm61 = vmor %vm44, %vm55
    %vm62 = vmor %vm45, %vm56
    %vm63 = vmor %vm46, %vm57
    %vm64 = vmor %vm47, %vm58
    %vm65 = vmor %vm48, %vm59
    %vm66 = vmor %vm49, %vm60
    %v67 = vld [vmem:[%s0 + $0x2] sm:$0x1]
    %v68 = vlaneseq
    %v69 = vshrl.u32 %v68, 7
    %v70 = vsub.s32 0, %v69
    %v71 = vrot.slane %v67, %v70
    %vm72 = vcmp.eq.s32.totalorder %v33, %v71
    %vm73 = vcmp.eq.s32.totalorder %v34, %v71
    %vm74 = vcmp.eq.s32.totalorder %v35, %v71
    %vm75 = vcmp.eq.s32.totalorder %v36, %v71
    %vm76 = vcmp.eq.s32.totalorder %v37, %v71
    %vm77 = vcmp.eq.s32.totalorder %v38, %v71
    %vm78 = vmor %vm61, %vm72
    %vm79 = vmor %vm62, %vm73
    %vm80 = vmor %vm63, %vm74
    %vm81 = vmor %vm64, %vm75
    %vm82 = vmor %vm65, %vm76
    %vm83 = vmor %vm66, %vm77
    %v84 = vld [vmem:[%s0 + $0x3] sm:$0x1]
    %v85 = vlaneseq
    %v86 = vshrl.u32 %v85, 7
    %v87 = vsub.s32 0, %v86
    %v88 = vrot.slane %v84, %v87
    %vm89 = vcmp.eq.s32.totalorder %v33, %v88
    %vm90 = vcmp.eq.s32.totalorder %v34, %v88
    %vm91 = vcmp.eq.s32.totalorder %v35, %v88
    %vm92 = vcmp.eq.s32.totalorder %v36, %v88
    %vm93 = vcmp.eq.s32.totalorder %v37, %v88
    %vm94 = vcmp.eq.s32.totalorder %v38, %v88
    %vm95 = vmor %vm78, %vm89
    %vm96 = vmor %vm79, %vm90
    %vm97 = vmor %vm80, %vm91
    %vm98 = vmor %vm81, %vm92
    %vm99 = vmor %vm82, %vm93
    %vm100 = vmor %vm83, %vm94
    %v101 = vsel %vm95, 1.0, 0.0
    %v102 = vsel %vm96, 1.0, 0.0
    %v103 = vsel %vm97, 1.0, 0.0
    %v104 = vsel %vm98, 1.0, 0.0
    %v105 = vsel %vm99, 1.0, 0.0
    %v106 = vsel %vm100, 1.0, 0.0
    %v107 = vld [vmem:[%s1] sm:$0xff]
    %v108 = vld [vmem:[%s2] sm:$0xff]
    %v109 = vld [vmem:[%s2 + $0x8] sm:$0xff]
    %v110 = vld [vmem:[%s2 + $0x10] sm:$0xff]
    %v111 = vld [vmem:[%s2 + $0x18] sm:$0xff]
    %v112 = vld [vmem:[%s2 + $0x20] sm:$0xff]
    %v113 = vld [vmem:[%s2 + $0x28] sm:$0xff]
    %v114 = vld [vmem:[%s2 + $0x30] sm:$0xff]
    %v115 = vld [vmem:[%s2 + $0x38] sm:$0xff]
    %v116 = vld [vmem:[%s3] sm:$0xff]
    %v117 = vld [vmem:[%s3 + $0x8] sm:$0xff]
    %v118 = vld [vmem:[%s3 + $0x10] sm:$0xff]
    %v119 = vld [vmem:[%s3 + $0x18] sm:$0xff]
    %v120 = vld [vmem:[%s3 + $0x20] sm:$0xff]
    %v121 = vld [vmem:[%s3 + $0x28] sm:$0xff]
    %v122 = vld [vmem:[%s3 + $0x30] sm:$0xff]
    %v123 = vld [vmem:[%s3 + $0x38] sm:$0xff]
    %125 = vset.pattern.permute.xlu0 0
    %126 = vperm.xlu0 %125, %v116
    %v127 = vpop.permute.xlu0 %126
    %130 = vset.pattern.permute.xlu0 0
    %131 = vperm.xlu0 %130, %v117
    %v132 = vpop.permute.xlu0 %131
    %135 = vset.pattern.permute.xlu0 0
    %136 = vperm.xlu0 %135, %v118
    %v137 = vpop.permute.xlu0 %136
    %140 = vset.pattern.permute.xlu0 0
    %141 = vperm.xlu0 %140, %v119
    %v142 = vpop.permute.xlu0 %141
    %145 = vset.pattern.permute.xlu0 0
    %146 = vperm.xlu0 %145, %v120
    %v147 = vpop.permute.xlu0 %146
    %150 = vset.pattern.permute.xlu0 0
    %151 = vperm.xlu0 %150, %v121
    %v152 = vpop.permute.xlu0 %151
    %155 = vset.pattern.permute.xlu0 0
    %156 = vperm.xlu0 %155, %v122
    %v157 = vpop.permute.xlu0 %156
    %160 = vset.pattern.permute.xlu0 0
    %161 = vperm.xlu0 %160, %v123
    %v162 = vpop.permute.xlu0 %161
    %vm164 = vcmask 457728
    %v166 = vsel %vm164, %v108, 0
    %v169 = vsel %vm164, %v109, 0
    %v172 = vsel %vm164, %v110, 0
    %v175 = vsel %vm164, %v111, 0
    %v178 = vsel %vm164, %v112, 0
    %v181 = vsel %vm164, %v113, 0
    %v184 = vsel %vm164, %v114, 0
    %v187 = vsel %vm164, %v115, 0
    %189 = vmatprep.subr.mxu0 0.0
    %190 = vmatpush1.msra.mxu0 %v101
    %191 = vmatprep.subr.mxu0 0.0
    %192 = vmatpush1.msra.mxu0 %v102
    %193 = vmatprep.subr.mxu0 0.0
    %194 = vmatpush1.msra.mxu0 %v103
    %195 = vmatprep.subr.mxu0 0.0
    %196 = vmatpush1.msra.mxu0 %v104
    %197 = vmatprep.subr.mxu0 0.0
    %198 = vmatpush1.msra.mxu0 %v105
    %199 = vmatprep.subr.mxu0 0.0
    %200 = vmatpush1.msra.mxu0 %v106
    %201 = vmatprep.subr.mxu0 0.0
    %202 = vmatpush1.msra.mxu0 %v107
    %203 = vmatprep.subr.mxu0 0.0
    %204 = vmatpush1.msra.mxu0 0.0
    %205 = vmatprep.subr.mxu0 0.0
    %206 = vmatpush1.msra.mxu0 0.0
    %207 = vmatprep.subr.mxu0 0.0
    %208 = vmatpush1.msra.mxu0 0.0
    %209 = vmatprep.subr.mxu0 0.0
    %210 = vmatpush1.msra.mxu0 0.0
    %211 = vmatprep.subr.mxu0 0.0
    %212 = vmatpush1.msra.mxu0 0.0
    %213 = vmatprep.subr.mxu0 0.0
    %214 = vmatpush1.msra.mxu0 0.0
    %215 = vmatprep.subr.mxu0 0.0
    %216 = vmatpush1.msra.mxu0 0.0
    %217 = vmatprep.subr.mxu0 0.0
    %218 = vmatpush1.msra.mxu0 0.0
    %219 = vmatprep.subr.mxu0 0.0
    %220 = vmatpush1.msra.mxu0 0.0
    %221 = vmatprep.subr.mxu0 0.0
    %222 = vmatpush1.msra.mxu0 0.0
    %223 = vmatprep.subr.mxu0 0.0
    %224 = vmatpush1.msra.mxu0 0.0
    %225 = vmatprep.subr.mxu0 0.0
    %226 = vmatpush1.msra.mxu0 0.0
    %227 = vmatprep.subr.mxu0 0.0
    %228 = vmatpush1.msra.mxu0 0.0
    %229 = vmatprep.subr.mxu0 0.0
    %230 = vmatpush1.msra.mxu0 0.0
    %231 = vmatprep.subr.mxu0 0.0
    %232 = vmatpush1.msra.mxu0 0.0
    %233 = vmatprep.subr.mxu0 0.0
    %234 = vmatpush1.msra.mxu0 0.0
    %235 = vmatprep.subr.mxu0 0.0
    %236 = vmatpush1.msra.mxu0 0.0
    %237 = vmatprep.subr.mxu0 0.0
    %238 = vmatpush1.msra.mxu0 0.0
    %239 = vmatprep.subr.mxu0 0.0
    %240 = vmatpush1.msra.mxu0 0.0
    %241 = vmatprep.subr.mxu0 0.0
    %242 = vmatpush1.msra.mxu0 0.0
    %243 = vmatprep.subr.mxu0 0.0
    %244 = vmatpush1.msra.mxu0 0.0
    %245 = vmatprep.subr.mxu0 0.0
    %246 = vmatpush1.msra.mxu0 0.0
    %247 = vmatprep.subr.mxu0 0.0
    %248 = vmatpush1.msra.mxu0 0.0
    %249 = vmatprep.subr.mxu0 0.0
    %250 = vmatpush1.msra.mxu0 0.0
    %251 = vmatprep.subr.mxu0 0.0
    %252 = vmatpush1.msra.mxu0 0.0
    %253 = vmatprep.mubr.f32.mxu0 0.0
    %254 = vmatmul.mubr.f32.gmra.mrb[0].mxu0 %v166
    %v255 = vpop.f32.mrb[0].mxu0
    %v256 = vadd.f32 %v127, %v255
    %v257 = vpop.f32.mrb[0].mxu0
    %258 = vmatprep.mubr.f32.mxu0 0.0
    %259 = vmatmul.mubr.f32.gmra.mrb[0].mxu0 %v169
    %v260 = vpop.f32.mrb[0].mxu0
    %v261 = vadd.f32 %v132, %v260
    %v262 = vpop.f32.mrb[0].mxu0
    %263 = vmatprep.mubr.f32.mxu0 0.0
    %264 = vmatmul.mubr.f32.gmra.mrb[0].mxu0 %v172
    %v265 = vpop.f32.mrb[0].mxu0
    %v266 = vadd.f32 %v137, %v265
    %v267 = vpop.f32.mrb[0].mxu0
    %268 = vmatprep.mubr.f32.mxu0 0.0
    %269 = vmatmul.mubr.f32.gmra.mrb[0].mxu0 %v175
    %v270 = vpop.f32.mrb[0].mxu0
    %v271 = vadd.f32 %v142, %v270
    %v272 = vpop.f32.mrb[0].mxu0
    %273 = vmatprep.mubr.f32.mxu0 0.0
    %274 = vmatmul.mubr.f32.gmra.mrb[0].mxu0 %v178
    %v275 = vpop.f32.mrb[0].mxu0
    %v276 = vadd.f32 %v147, %v275
    %v277 = vpop.f32.mrb[0].mxu0
    %278 = vmatprep.mubr.f32.mxu0 0.0
    %279 = vmatmul.mubr.f32.gmra.mrb[0].mxu0 %v181
    %v280 = vpop.f32.mrb[0].mxu0
    %v281 = vadd.f32 %v152, %v280
    %v282 = vpop.f32.mrb[0].mxu0
    %283 = vmatprep.mubr.f32.mxu0 0.0
    %284 = vmatmul.mubr.f32.gmra.mrb[0].mxu0 %v184
    %v285 = vpop.f32.mrb[0].mxu0
    %v286 = vadd.f32 %v157, %v285
    %v287 = vpop.f32.mrb[0].mxu0
    %288 = vmatprep.mubr.f32.mxu0 0.0
    %289 = vmatmul.mubr.f32.gmra.mrb[0].mxu0 %v187
    %v290 = vpop.f32.mrb[0].mxu0
    %v291 = vadd.f32 %v162, %v290
    %v292 = vpop.f32.mrb[0].mxu0
    %293 = vdwg.mxu0
    %v294 = vmax.f32 %v256, 0.0
    %v295 = vmax.f32 %v261, 0.0
    %v296 = vmax.f32 %v266, 0.0
    %v297 = vmax.f32 %v271, 0.0
    %v298 = vmax.f32 %v276, 0.0
    %v299 = vmax.f32 %v281, 0.0
    %v300 = vmax.f32 %v286, 0.0
    %v301 = vmax.f32 %v291, 0.0
    %v302 = vld [vmem:[%s4] sm:$0xff]
    %v303 = vld [vmem:[%s4 + $0x8] sm:$0xff]
    %v304 = vld [vmem:[%s4 + $0x10] sm:$0xff]
    %v305 = vld [vmem:[%s4 + $0x18] sm:$0xff]
    %v306 = vld [vmem:[%s5] sm:$0xff]
    %v307 = vld [vmem:[%s5 + $0x8] sm:$0xff]
    %v308 = vld [vmem:[%s5 + $0x10] sm:$0xff]
    %v309 = vld [vmem:[%s5 + $0x18] sm:$0xff]
    %311 = vset.pattern.permute.xlu0 0
    %312 = vperm.xlu0 %311, %v306
    %v313 = vpop.permute.xlu0 %312
    %316 = vset.pattern.permute.xlu0 0
    %317 = vperm.xlu0 %316, %v307
    %v318 = vpop.permute.xlu0 %317
    %321 = vset.pattern.permute.xlu0 0
    %322 = vperm.xlu0 %321, %v308
    %v323 = vpop.permute.xlu0 %322
    %326 = vset.pattern.permute.xlu0 0
    %327 = vperm.xlu0 %326, %v309
    %v328 = vpop.permute.xlu0 %327
    %vm330 = vcmask 523264
    %v332 = vsel %vm330, %v302, 0
    %v335 = vsel %vm330, %v303, 0
    %v338 = vsel %vm330, %v304, 0
    %v341 = vsel %vm330, %v305, 0
    %343 = vmatprep.subr.mxu0 0.0
    %344 = vmatpush1.msra.mxu0 %v294
    %345 = vmatprep.subr.mxu0 0.0
    %346 = vmatpush1.msra.mxu0 %v295
    %347 = vmatprep.subr.mxu0 0.0
    %348 = vmatpush1.msra.mxu0 %v296
    %349 = vmatprep.subr.mxu0 0.0
    %350 = vmatpush1.msra.mxu0 %v297
    %351 = vmatprep.subr.mxu0 0.0
    %352 = vmatpush1.msra.mxu0 %v298
    %353 = vmatprep.subr.mxu0 0.0
    %354 = vmatpush1.msra.mxu0 %v299
    %355 = vmatprep.subr.mxu0 0.0
    %356 = vmatpush1.msra.mxu0 %v300
    %357 = vmatprep.subr.mxu0 0.0
    %358 = vmatpush1.msra.mxu0 %v301
    %359 = vmatprep.subr.mxu0 0.0
    %360 = vmatpush1.msra.mxu0 0.0
    %361 = vmatprep.subr.mxu0 0.0
    %362 = vmatpush1.msra.mxu0 0.0
    %363 = vmatprep.subr.mxu0 0.0
    %364 = vmatpush1.msra.mxu0 0.0
    %365 = vmatprep.subr.mxu0 0.0
    %366 = vmatpush1.msra.mxu0 0.0
    %367 = vmatprep.subr.mxu0 0.0
    %368 = vmatpush1.msra.mxu0 0.0
    %369 = vmatprep.subr.mxu0 0.0
    %370 = vmatpush1.msra.mxu0 0.0
    %371 = vmatprep.subr.mxu0 0.0
    %372 = vmatpush1.msra.mxu0 0.0
    %373 = vmatprep.subr.mxu0 0.0
    %374 = vmatpush1.msra.mxu0 0.0
    %375 = vmatprep.subr.mxu0 0.0
    %376 = vmatpush1.msra.mxu0 0.0
    %377 = vmatprep.subr.mxu0 0.0
    %378 = vmatpush1.msra.mxu0 0.0
    %379 = vmatprep.subr.mxu0 0.0
    %380 = vmatpush1.msra.mxu0 0.0
    %381 = vmatprep.subr.mxu0 0.0
    %382 = vmatpush1.msra.mxu0 0.0
    %383 = vmatprep.subr.mxu0 0.0
    %384 = vmatpush1.msra.mxu0 0.0
    %385 = vmatprep.subr.mxu0 0.0
    %386 = vmatpush1.msra.mxu0 0.0
    %387 = vmatprep.subr.mxu0 0.0
    %388 = vmatpush1.msra.mxu0 0.0
    %389 = vmatprep.subr.mxu0 0.0
    %390 = vmatpush1.msra.mxu0 0.0
    %391 = vmatprep.subr.mxu0 0.0
    %392 = vmatpush1.msra.mxu0 0.0
    %393 = vmatprep.subr.mxu0 0.0
    %394 = vmatpush1.msra.mxu0 0.0
    %395 = vmatprep.subr.mxu0 0.0
    %396 = vmatpush1.msra.mxu0 0.0
    %397 = vmatprep.subr.mxu0 0.0
    %398 = vmatpush1.msra.mxu0 0.0
    %399 = vmatprep.subr.mxu0 0.0
    %400 = vmatpush1.msra.mxu0 0.0
    %401 = vmatprep.subr.mxu0 0.0
    %402 = vmatpush1.msra.mxu0 0.0
    %403 = vmatprep.subr.mxu0 0.0
    %404 = vmatpush1.msra.mxu0 0.0
    %405 = vmatprep.subr.mxu0 0.0
    %406 = vmatpush1.msra.mxu0 0.0
    %407 = vmatprep.mubr.f32.mxu0 0.0
    %408 = vmatmul.mubr.f32.gmra.mrb[0].mxu0 %v332
    %v409 = vpop.f32.mrb[0].mxu0
    %v410 = vadd.f32 %v313, %v409
    %v411 = vpop.f32.mrb[0].mxu0
    %412 = vmatprep.mubr.f32.mxu0 0.0
    %413 = vmatmul.mubr.f32.gmra.mrb[0].mxu0 %v335
    %v414 = vpop.f32.mrb[0].mxu0
    %v415 = vadd.f32 %v318, %v414
    %v416 = vpop.f32.mrb[0].mxu0
    %417 = vmatprep.mubr.f32.mxu0 0.0
    %418 = vmatmul.mubr.f32.gmra.mrb[0].mxu0 %v338
    %v419 = vpop.f32.mrb[0].mxu0
    %v420 = vadd.f32 %v323, %v419
    %v421 = vpop.f32.mrb[0].mxu0
    %422 = vmatprep.mubr.f32.mxu0 0.0
    %423 = vmatmul.mubr.f32.gmra.mrb[0].mxu0 %v341
    %v424 = vpop.f32.mrb[0].mxu0
    %v425 = vadd.f32 %v328, %v424
    %v426 = vpop.f32.mrb[0].mxu0
    %427 = vdwg.mxu0
    %v428 = vmax.f32 %v410, 0.0
    %v429 = vmax.f32 %v415, 0.0
    %v430 = vmax.f32 %v420, 0.0
    %v431 = vmax.f32 %v425, 0.0
    %v432 = vld [vmem:[%s6] sm:$0x1]
    %v433 = vld [vmem:[#allocation2] sm:$0x1]
    %435 = vset.pattern.permute.xlu0 0
    %436 = vperm.xlu0 %435, %v433
    %v437 = vpop.permute.xlu0 %436
    %v439 = vlaneseq
    %v440 = vshrl.u32 %v439, 7
    %v441 = vsub.s32 0, %v440
    %v442 = vrot.slane %v437, %v441
    %vm443 = vcmask 261120
    %v445 = vsel %vm443, %v432, 0
    %447 = vmatprep.subr.mxu0 0.0
    %448 = vmatpush1.msra.mxu0 %v428
    %449 = vmatprep.subr.mxu0 0.0
    %450 = vmatpush1.msra.mxu0 %v429
    %451 = vmatprep.subr.mxu0 0.0
    %452 = vmatpush1.msra.mxu0 %v430
    %453 = vmatprep.subr.mxu0 0.0
    %454 = vmatpush1.msra.mxu0 %v431
    %455 = vmatprep.subr.mxu0 0.0
    %456 = vmatpush1.msra.mxu0 0.0
    %457 = vmatprep.subr.mxu0 0.0
    %458 = vmatpush1.msra.mxu0 0.0
    %459 = vmatprep.subr.mxu0 0.0
    %460 = vmatpush1.msra.mxu0 0.0
    %461 = vmatprep.subr.mxu0 0.0
    %462 = vmatpush1.msra.mxu0 0.0
    %463 = vmatprep.subr.mxu0 0.0
    %464 = vmatpush1.msra.mxu0 0.0
    %465 = vmatprep.subr.mxu0 0.0
    %466 = vmatpush1.msra.mxu0 0.0
    %467 = vmatprep.subr.mxu0 0.0
    %468 = vmatpush1.msra.mxu0 0.0
    %469 = vmatprep.subr.mxu0 0.0
    %470 = vmatpush1.msra.mxu0 0.0
    %471 = vmatprep.subr.mxu0 0.0
    %472 = vmatpush1.msra.mxu0 0.0
    %473 = vmatprep.subr.mxu0 0.0
    %474 = vmatpush1.msra.mxu0 0.0
    %475 = vmatprep.subr.mxu0 0.0
    %476 = vmatpush1.msra.mxu0 0.0
    %477 = vmatprep.subr.mxu0 0.0
    %478 = vmatpush1.msra.mxu0 0.0
    %479 = vmatprep.subr.mxu0 0.0
    %480 = vmatpush1.msra.mxu0 0.0
    %481 = vmatprep.subr.mxu0 0.0
    %482 = vmatpush1.msra.mxu0 0.0
    %483 = vmatprep.subr.mxu0 0.0
    %484 = vmatpush1.msra.mxu0 0.0
    %485 = vmatprep.subr.mxu0 0.0
    %486 = vmatpush1.msra.mxu0 0.0
    %487 = vmatprep.subr.mxu0 0.0
    %488 = vmatpush1.msra.mxu0 0.0
    %489 = vmatprep.subr.mxu0 0.0
    %490 = vmatpush1.msra.mxu0 0.0
    %491 = vmatprep.subr.mxu0 0.0
    %492 = vmatpush1.msra.mxu0 0.0
    %493 = vmatprep.subr.mxu0 0.0
    %494 = vmatpush1.msra.mxu0 0.0
    %495 = vmatprep.subr.mxu0 0.0
    %496 = vmatpush1.msra.mxu0 0.0
    %497 = vmatprep.subr.mxu0 0.0
    %498 = vmatpush1.msra.mxu0 0.0
    %499 = vmatprep.subr.mxu0 0.0
    %500 = vmatpush1.msra.mxu0 0.0
    %501 = vmatprep.subr.mxu0 0.0
    %502 = vmatpush1.msra.mxu0 0.0
    %503 = vmatprep.subr.mxu0 0.0
    %504 = vmatpush1.msra.mxu0 0.0
    %505 = vmatprep.subr.mxu0 0.0
    %506 = vmatpush1.msra.mxu0 0.0
    %507 = vmatprep.subr.mxu0 0.0
    %508 = vmatpush1.msra.mxu0 0.0
    %509 = vmatprep.subr.mxu0 0.0
    %510 = vmatpush1.msra.mxu0 0.0
    %511 = vmatprep.mubr.f32.mxu0 0.0
    %512 = vmatmul.mubr.f32.gmra.mrb[0].mxu0 %v445
    %v513 = vpop.f32.mrb[0].mxu0
    %v514 = vadd.f32 %v442, %v513
    %v515 = vpop.f32.mrb[0].mxu0
    %516 = vdwg.mxu0
    %517 = vst [vmem:[#allocation3] sm:$0x1] %v514
    // Predicated region
    $region34: #{tpu_custom_call.1} parent=1 // pred_check
      _
    $region35: #{tpu_custom_call.1} parent=1 // pred_check_branch
      %519 = sbr.rel (0) target = $region37
    $region36: #{tpu_custom_call.1} parent=1 // pred_region
      %s521 = ssub.s32 16, 16
      %522 = vsyncadd [#allocation4], %s521
      %s524 = sshll.u32 [#allocation3], 4
      %s525 = int_to_ptr.vmem [resolvable:$true] %s524
      %527 = dma.vmem_to_hbm [thread:$0]  %s525, 16, %s8, [#allocation4]
    $region37: #{tpu_custom_call.1} parent=1 // pred_fallthru
      _
    // Predicated region
    $region38: #{tpu_custom_call.1} parent=1 // pred_check
      _
    $region39: #{tpu_custom_call.1} parent=1 // pred_check_branch
      %529 = sbr.rel (0) target = $region41
    $region40: #{tpu_custom_call.1} parent=1 // pred_region
      %530 = dma.done [#allocation4], 16
    $region41: #{tpu_custom_call.1} parent=1 // pred_fallthru
      _
    %531 = vsyncpa [#allocation4], 1

</llo_original>
